<compile_context>
chip_gen: v6e
topology: v6e:2x2x1
jax: 0.10.0
libtpu: 0.0.40
codegen_flags: <defaults>
</compile_context>

<pallas_src>
import functools
import math

import jax
import jax.numpy as jnp
from jax.experimental import pallas as pl
from jax.experimental.pallas import tpu as pltpu

_VMEM_LIMIT = 48 * 1024 * 1024  # leave headroom under v7x's 64 MiB physical VMEM


# ---------------------------------------------------------------------------
# helpers
# ---------------------------------------------------------------------------
def _erf_approx(x):
    # Abramowitz & Stegun 7.1.26 (max abs error 1.5e-7).  Uses only exp/mul/add,
    # which are guaranteed to lower in Mosaic (erf itself may not).
    a1, a2, a3, a4, a5 = 0.254829592, -0.284496736, 1.421413741, -1.453152027, 1.061405429
    p = 0.3275911
    sign = jnp.where(x >= 0.0, 1.0, -1.0)
    ax = jnp.abs(x)
    t = 1.0 / (1.0 + p * ax)
    poly = ((((a5 * t + a4) * t + a3) * t + a2) * t + a1) * t
    return sign * (1.0 - poly * jnp.exp(-ax * ax))


def _gelu(x):
    # Matches the module's erf-based gelu: x * 0.5 * (1 + erf(x / sqrt(2)))
    return x * 0.5 * (1.0 + _erf_approx(x * 0.7071067811865476))


def _pick_heads_per_block(num_heads, head_dim, hidden):
    """Smallest head block whose lane width is 128-aligned (or full H)."""
    for hb in range(1, num_heads + 1):
        if num_heads % hb:
            continue
        width = hb * head_dim
        if width % 128 == 0 or width == hidden:
            return hb
    return num_heads


# ---------------------------------------------------------------------------
# Kernel 1: fused Q/K/V projection (one matmul, three lane-contiguous outputs)
# ---------------------------------------------------------------------------
def _qkv_proj_kernel(x_ref, w_ref, b_ref, q_ref, k_ref, v_ref):
    x = x_ref[...].astype(w_ref.dtype)                      # bf16 for the MXU
    y = jnp.dot(x, w_ref[...], preferred_element_type=jnp.float32) + b_ref[...]
    h = q_ref.shape[-1]
    q_ref[...] = y[:, :h].astype(q_ref.dtype)
    k_ref[...] = y[:, h:2 * h].astype(k_ref.dtype)
    v_ref[...] = y[:, 2 * h:].astype(v_ref.dtype)


def _qkv_projection(x2d, w_qkv, b_qkv, *, out_dtype=jnp.bfloat16, tm=512):
    M, K = x2d.shape
    N3 = w_qkv.shape[1]
    H = N3 // 3
    tm = min(tm, M)
    grid = (pl.cdiv(M, tm),)
    return pl.pallas_call(
        _qkv_proj_kernel,
        out_shape=tuple(jax.ShapeDtypeStruct((M, H), out_dtype) for _ in range(3)),
        grid_spec=pltpu.PrefetchScalarGridSpec(
            num_scalar_prefetch=0,
            grid=grid,
            in_specs=[
                pl.BlockSpec((tm, K), lambda i: (i, 0)),     # x tile (pipelined)
                pl.BlockSpec((K, N3), lambda i: (0, 0)),     # fused QKV weight (resident)
                pl.BlockSpec((1, N3), lambda i: (0, 0)),     # fused bias
            ],
            out_specs=[
                pl.BlockSpec((tm, H), lambda i: (i, 0)),
                pl.BlockSpec((tm, H), lambda i: (i, 0)),
                pl.BlockSpec((tm, H), lambda i: (i, 0)),
            ],
        ),
        compiler_params=pltpu.CompilerParams(
            dimension_semantics=("parallel",),
            vmem_limit_bytes=_VMEM_LIMIT),
    )(x2d, w_qkv, b_qkv)


# ---------------------------------------------------------------------------
# Kernel 2: per-(batch, head-block) attention on [B, S, H] layout
# ---------------------------------------------------------------------------
def _attn_kernel(q_ref, k_ref, v_ref, mask_ref, o_ref, *,
                 heads_per_block, head_dim, scale):
    d = head_dim
    q = q_ref[0] * scale                                    # bf16 [S, hb*D]; scale folded into q
    k = k_ref[0]
    v = v_ref[0]
    m = mask_ref[0, 0]                                      # [1, S] additive mask (f32)

    ctxs = []
    for h in range(heads_per_block):
        sl = slice(h * d, (h + 1) * d)
        qh, kh, vh = q[:, sl], k[:, sl], v[:, sl]
        # q @ k^T expressed as a contraction (no materialized transpose).
        s = jax.lax.dot_general(qh, kh, (((1,), (1,)), ((), ())),
                                preferred_element_type=jnp.float32)      # [S, S] f32
        s = s + m                                            # broadcast over query rows
        s = s - jnp.max(s, axis=-1, keepdims=True)           # stable softmax
        p = jnp.exp(s)
        p = p * pl.reciprocal(jnp.sum(p, axis=-1, keepdims=True), approx=True)
        ctxs.append(jnp.dot(p.astype(vh.dtype), vh,
                            preferred_element_type=jnp.float32))         # [S, D] f32

    out = ctxs[0] if heads_per_block == 1 else jnp.concatenate(ctxs, axis=-1)
    o_ref[0] = out.astype(o_ref.dtype)                       # single lane-dense store


def _self_attention(q3, k3, v3, attn_mask, num_heads, *, out_dtype=jnp.bfloat16):
    B, S, H = q3.shape
    D = H // num_heads
    hb = _pick_heads_per_block(num_heads, D, H)
    nblk = num_heads // hb
    bw = hb * D
    scale = 1.0 / math.sqrt(D)

    return pl.pallas_call(
        functools.partial(_attn_kernel, heads_per_block=hb, head_dim=D, scale=scale),
        out_shape=jax.ShapeDtypeStruct((B, S, H), out_dtype),
        grid_spec=pltpu.PrefetchScalarGridSpec(
            num_scalar_prefetch=0,
            grid=(B, nblk),
            in_specs=[
                pl.BlockSpec((1, S, bw), lambda b, h: (b, 0, h)),        # Q head block
                pl.BlockSpec((1, S, bw), lambda b, h: (b, 0, h)),        # K head block
                pl.BlockSpec((1, S, bw), lambda b, h: (b, 0, h)),        # V head block
                pl.BlockSpec((1, 1, 1, S), lambda b, h: (b, 0, 0, 0)),   # additive mask
            ],
            out_specs=pl.BlockSpec((1, S, bw), lambda b, h: (b, 0, h)),  # context in [B,S,H]
        ),
        compiler_params=pltpu.CompilerParams(
            dimension_semantics=("parallel", "parallel"),
            vmem_limit_bytes=_VMEM_LIMIT),
    )(q3, k3, v3, attn_mask)


# ---------------------------------------------------------------------------
# Kernel 3: dense (+ optional GELU)  — BertIntermediate
# ---------------------------------------------------------------------------
def _dense_act_kernel(x_ref, w_ref, b_ref, o_ref, *, activation):
    x = x_ref[...].astype(w_ref.dtype)
    y = jnp.dot(x, w_ref[...], preferred_element_type=jnp.float32) + b_ref[...]
    if activation == "gelu":
        y = _gelu(y)
    o_ref[...] = y.astype(o_ref.dtype)


def _dense(x, w, b, *, activation=None, out_dtype=jnp.float32, tm=512):
    M, K = x.shape
    _, N = w.shape
    tm = min(tm, M)
    grid = (pl.cdiv(M, tm),)
    return pl.pallas_call(
        functools.partial(_dense_act_kernel, activation=activation),
        out_shape=jax.ShapeDtypeStruct((M, N), out_dtype),
        grid_spec=pltpu.PrefetchScalarGridSpec(
            num_scalar_prefetch=0,
            grid=grid,
            in_specs=[
                pl.BlockSpec((tm, K), lambda i: (i, 0)),
                pl.BlockSpec((K, N), lambda i: (0, 0)),
                pl.BlockSpec((1, N), lambda i: (0, 0)),
            ],
            out_specs=pl.BlockSpec((tm, N), lambda i: (i, 0)),
        ),
        compiler_params=pltpu.CompilerParams(
            dimension_semantics=("parallel",),
            vmem_limit_bytes=_VMEM_LIMIT),
    )(x, w, b)


# ---------------------------------------------------------------------------
# Kernel 4: dense + residual + LayerNorm fused — BertSelfOutput / BertOutput
# ---------------------------------------------------------------------------
def _dense_res_ln_kernel(x_ref, res_ref, w_ref, b_ref, g_ref, beta_ref, o_ref, *, eps):
    x = x_ref[...].astype(w_ref.dtype)
    y = jnp.dot(x, w_ref[...], preferred_element_type=jnp.float32) + b_ref[...]
    y = y + res_ref[...].astype(jnp.float32)                 # residual (dropout = identity, eval)
    mu = jnp.mean(y, axis=-1, keepdims=True)
    d = y - mu
    var = jnp.mean(d * d, axis=-1, keepdims=True)
    y = d * jax.lax.rsqrt(var + eps)
    o_ref[...] = (y * g_ref[...] + beta_ref[...]).astype(o_ref.dtype)


def _dense_residual_layernorm(x, res, w, b, gamma, beta, *, eps,
                              out_dtype=jnp.float32, tm=512):
    M, K = x.shape
    _, N = w.shape
    tm = min(tm, M)
    grid = (pl.cdiv(M, tm),)
    return pl.pallas_call(
        functools.partial(_dense_res_ln_kernel, eps=eps),
        out_shape=jax.ShapeDtypeStruct((M, N), out_dtype),
        grid_spec=pltpu.PrefetchScalarGridSpec(
            num_scalar_prefetch=0,
            grid=grid,
            in_specs=[
                pl.BlockSpec((tm, K), lambda i: (i, 0)),
                pl.BlockSpec((tm, N), lambda i: (i, 0)),
                pl.BlockSpec((K, N), lambda i: (0, 0)),
                pl.BlockSpec((1, N), lambda i: (0, 0)),
                pl.BlockSpec((1, N), lambda i: (0, 0)),
                pl.BlockSpec((1, N), lambda i: (0, 0)),
            ],
            out_specs=pl.BlockSpec((tm, N), lambda i: (i, 0)),
        ),
        compiler_params=pltpu.CompilerParams(
            dimension_semantics=("parallel",),
            vmem_limit_bytes=_VMEM_LIMIT),
    )(x, res, w, b, gamma, beta)


# ---------------------------------------------------------------------------
# BertEncoder forward (eval mode)
# ---------------------------------------------------------------------------
def bert_encoder(hidden_states, layer_params, attention_mask=None, *,
                 num_attention_heads, layer_norm_eps=1e-12):
    B, S, H = hidden_states.shape
    M = B * S
    if attention_mask is None:
        attention_mask = jnp.zeros((B, 1, 1, S), jnp.float32)
    attention_mask = attention_mask.astype(jnp.float32)

    x = hidden_states.astype(jnp.float32)
    for p in layer_params:
        x2d = x.reshape(M, H)
        # --- BertSelfAttention ---
        q2d, k2d, v2d = _qkv_projection(x2d, p["w_qkv"], p["b_qkv"])
        ctx = _self_attention(q2d.reshape(B, S, H), k2d.reshape(B, S, H),
                              v2d.reshape(B, S, H), attention_mask,
                              num_attention_heads)
        # --- BertSelfOutput: dense + residual + LayerNorm ---
        attn_out = _dense_residual_layernorm(
            ctx.reshape(M, H), x2d, p["w_ao"], p["b_ao"],
            p["ln1_g"], p["ln1_b"], eps=layer_norm_eps)
        # --- BertIntermediate: dense + gelu ---
        inter = _dense(attn_out, p["w_i"], p["b_i"], activation="gelu",
                       out_dtype=jnp.bfloat16)
        # --- BertOutput: dense + residual + LayerNorm ---
        x2d_new = _dense_residual_layernorm(
            inter, attn_out, p["w_o"], p["b_o"],
            p["ln2_g"], p["ln2_b"], eps=layer_norm_eps)
        x = x2d_new.reshape(B, S, H)
    return (x,)


def prepare_layer_params(p):
    """PyTorch-style [out,in] weights -> kernel layout (transposed, QKV fused, bf16)."""
    bf16, f32 = jnp.bfloat16, jnp.float32
    return {
        "w_qkv": jnp.concatenate([p["wq"].T, p["wk"].T, p["wv"].T], axis=1).astype(bf16),
        "b_qkv": jnp.concatenate([p["bq"], p["bk"], p["bv"]])[None, :].astype(f32),
        "w_ao": p["wo"].T.astype(bf16),  "b_ao": p["bo"][None, :].astype(f32),
        "ln1_g": p["ln1_g"][None, :].astype(f32), "ln1_b": p["ln1_b"][None, :].astype(f32),
        "w_i": p["wi"].T.astype(bf16),   "b_i": p["bi"][None, :].astype(f32),
        "w_o": p["wo2"].T.astype(bf16),  "b_o": p["bo2"][None, :].astype(f32),
        "ln2_g": p["ln2_g"][None, :].astype(f32), "ln2_b": p["ln2_b"][None, :].astype(f32),
    }


# ---------------------------------------------------------------------------
# Pure-JAX reference (module semantics, mirroring the kernels' bf16 matmul policy)
# ---------------------------------------------------------------------------
def _reference_encoder(hidden_states, raw_layers, attention_mask, num_heads, eps):
    bf16 = jnp.bfloat16
    B, S, H = hidden_states.shape
    D = H // num_heads
    scale = 1.0 / math.sqrt(D)

    def linear(x, w, b):
        return jnp.dot(x.astype(bf16), w.T.astype(bf16),
                       preferred_element_type=jnp.float32) + b

    def layer_norm(x, g, b):
        mu = jnp.mean(x, axis=-1, keepdims=True)
        var = jnp.mean((x - mu) ** 2, axis=-1, keepdims=True)
        return (x - mu) * jax.lax.rsqrt(var + eps) * g + b

    def split_heads(t):
        return t.reshape(B, S, num_heads, D).transpose(0, 2, 1, 3)

    x = hidden_states.astype(jnp.float32)
    for p in raw_layers:
        q = linear(x, p["wq"], p["bq"]).astype(bf16)
        k = linear(x, p["wk"], p["bk"]).astype(bf16)
        v = linear(x, p["wv"], p["bv"]).astype(bf16)
        qh, kh, vh = split_heads(q * scale), split_heads(k), split_heads(v)
        scores = jnp.einsum("bhqd,bhkd->bhqk", qh, kh,
                            preferred_element_type=jnp.float32)
        scores = scores + attention_mask
        probs = jax.nn.softmax(scores, axis=-1)
        ctx = jnp.einsum("bhqk,bhkd->bhqd", probs.astype(bf16), vh,
                         preferred_element_type=jnp.float32)
        ctx = ctx.transpose(0, 2, 1, 3).reshape(B, S, H)
        attn_out = layer_norm(linear(ctx, p["wo"], p["bo"]) + x,
                              p["ln1_g"], p["ln1_b"])
        inter = linear(attn_out, p["wi"], p["bi"])
        inter = inter * 0.5 * (1.0 + jax.lax.erf(inter / math.sqrt(2.0)))
        x = layer_norm(linear(inter, p["wo2"], p["bo2"]) + attn_out,
                       p["ln2_g"], p["ln2_b"])
    return x


# ---------------------------------------------------------------------------
if __name__ == "__main__":
    # Small config consistent with the module: hidden % heads == 0.
    B, S, H, nH, I, L = 2, 8, 256, 2, 512, 2
    eps = 1e-12

    def init_layer(key, hidden, inter):
        ks = jax.random.split(key, 16)
        w = lambda k, o, i: jax.random.normal(k, (o, i), jnp.float32) * 0.05
        b = lambda k, o: jax.random.normal(k, (o,), jnp.float32) * 0.05
        return {
            "wq": w(ks[0], hidden, hidden), "bq": b(ks[1], hidden),
            "wk": w(ks[2], hidden, hidden), "bk": b(ks[3], hidden),
            "wv": w(ks[4], hidden, hidden), "bv": b(ks[5], hidden),
            "wo": w(ks[6], hidden, hidden), "bo": b(ks[7], hidden),
            "wi": w(ks[8], inter, hidden),  "bi": b(ks[9], inter),
            "wo2": w(ks[10], hidden, inter), "bo2": b(ks[11], hidden),
            "ln1_g": 1.0 + 0.1 * jax.random.normal(ks[12], (hidden,), jnp.float32),
            "ln1_b": 0.1 * jax.random.normal(ks[13], (hidden,), jnp.float32),
            "ln2_g": 1.0 + 0.1 * jax.random.normal(ks[14], (hidden,), jnp.float32),
            "ln2_b": 0.1 * jax.random.normal(ks[15], (hidden,), jnp.float32),
        }

    key = jax.random.PRNGKey(0)
    key, hk, mk = jax.random.split(key, 3)
    hidden = jax.random.normal(hk, (B, S, H), jnp.float32)
    keep = (jax.random.uniform(mk, (B, 1, 1, S)) > 0.2).astype(jnp.float32)
    attention_mask = (1.0 - keep) * -10000.0                 # BERT-style additive mask

    raw_layers = [init_layer(k, H, I) for k in jax.random.split(key, L)]
    prepared = [prepare_layer_params(p) for p in raw_layers]

    (out,) = bert_encoder(hidden, prepared, attention_mask,
                          num_attention_heads=nH, layer_norm_eps=eps)
    out = jax.block_until_ready(out)

    ref = _reference_encoder(hidden, raw_layers, attention_mask, nH, eps)
    assert out.shape == (B, S, H)
    max_err = float(jnp.max(jnp.abs(out - ref)))
    assert jnp.allclose(out, ref, rtol=1e-2, atol=1e-2), \
        f"mismatch vs reference (max abs err {max_err})"

    print("KERNEL_OK")
</pallas_src>

<mosaic_0001>
module attributes {stable_mosaic.version = 11 : i64} {
  func.func @_qkv_proj_kernel(%arg0: i32, %arg1: memref<16x256xf32, #tpu.memory_space<vmem>>, %arg2: memref<256x768xbf16, #tpu.memory_space<vmem>>, %arg3: memref<1x768xf32, #tpu.memory_space<vmem>>, %arg4: memref<16x256xbf16, #tpu.memory_space<vmem>>, %arg5: memref<16x256xbf16, #tpu.memory_space<vmem>>, %arg6: memref<16x256xbf16, #tpu.memory_space<vmem>>) attributes {dimension_semantics = [#tpu.dimension_semantics<parallel>], iteration_bounds = array<i64: 1>, scalar_prefetch = 0 : i64, scratch_operands = 0 : i64, tpu.core_type = #tpu.core_type<tc>, window_params = [{transform_indices = @transform_0, window_bounds = array<i64: 16, 256>}, {pipeline_mode = #tpu.pipeline_mode<synchronous>, transform_indices = @transform_1, window_bounds = array<i64: 256, 768>}, {pipeline_mode = #tpu.pipeline_mode<synchronous>, transform_indices = @transform_2, window_bounds = array<i64: 1, 768>}, {transform_indices = @transform_3, window_bounds = array<i64: 16, 256>}, {transform_indices = @transform_4, window_bounds = array<i64: 16, 256>}, {transform_indices = @transform_5, window_bounds = array<i64: 16, 256>}]} {
    %c0 = arith.constant 0 : index
    %c0_0 = arith.constant 0 : index
    %0 = vector.load %arg1[%c0, %c0_0] : memref<16x256xf32, #tpu.memory_space<vmem>>, vector<16x256xf32>
    %1 = arith.truncf %0 : vector<16x256xf32> to vector<16x256xbf16>
    %c0_1 = arith.constant 0 : index
    %c0_2 = arith.constant 0 : index
    %2 = vector.load %arg2[%c0_1, %c0_2] : memref<256x768xbf16, #tpu.memory_space<vmem>>, vector<256x768xbf16>
    %cst = arith.constant dense<0.000000e+00> : vector<16x768xf32>
    %3 = tpu.matmul %1, %2, %cst {dimension_numbers = #tpu.dot_dimension_numbers<[1], [0], [0], [1], [0, 0, 1, 1], [], []>} : vector<16x256xbf16>, vector<256x768xbf16>, vector<16x768xf32> -> vector<16x768xf32>
    %c0_3 = arith.constant 0 : index
    %c0_4 = arith.constant 0 : index
    %4 = vector.load %arg3[%c0_3, %c0_4] : memref<1x768xf32, #tpu.memory_space<vmem>>, vector<1x768xf32>
    %5 = vector.broadcast %4 : vector<1x768xf32> to vector<16x768xf32>
    %6 = arith.addf %3, %5 : vector<16x768xf32>
    %7 = vector.extract_strided_slice %6 {offsets = [0, 0], sizes = [16, 256], strides = [1, 1]} : vector<16x768xf32> to vector<16x256xf32>
    %8 = arith.truncf %7 : vector<16x256xf32> to vector<16x256xbf16>
    %c0_5 = arith.constant 0 : index
    %c0_6 = arith.constant 0 : index
    %9 = vector.load %arg4[%c0_5, %c0_6] : memref<16x256xbf16, #tpu.memory_space<vmem>>, vector<16x256xbf16>
    tpu.vector_store %arg4[%c0_5, %c0_6], %8 {strides = array<i32>} : memref<16x256xbf16, #tpu.memory_space<vmem>>, vector<16x256xbf16>,
    %10 = vector.extract_strided_slice %6 {offsets = [0, 256], sizes = [16, 256], strides = [1, 1]} : vector<16x768xf32> to vector<16x256xf32>
    %11 = arith.truncf %10 : vector<16x256xf32> to vector<16x256xbf16>
    %c0_7 = arith.constant 0 : index
    %c0_8 = arith.constant 0 : index
    %12 = vector.load %arg5[%c0_7, %c0_8] : memref<16x256xbf16, #tpu.memory_space<vmem>>, vector<16x256xbf16>
    tpu.vector_store %arg5[%c0_7, %c0_8], %11 {strides = array<i32>} : memref<16x256xbf16, #tpu.memory_space<vmem>>, vector<16x256xbf16>,
    %13 = vector.extract_strided_slice %6 {offsets = [0, 512], sizes = [16, 256], strides = [1, 1]} : vector<16x768xf32> to vector<16x256xf32>
    %14 = arith.truncf %13 : vector<16x256xf32> to vector<16x256xbf16>
    %c0_9 = arith.constant 0 : index
    %c0_10 = arith.constant 0 : index
    %15 = vector.load %arg6[%c0_9, %c0_10] : memref<16x256xbf16, #tpu.memory_space<vmem>>, vector<16x256xbf16>
    tpu.vector_store %arg6[%c0_9, %c0_10], %14 {strides = array<i32>} : memref<16x256xbf16, #tpu.memory_space<vmem>>, vector<16x256xbf16>,
    return
  }
  func.func @transform_0(%arg0: i32) -> (i32, i32) {
    %c0_i32 = arith.constant 0 : i32
    %c0_i32_0 = arith.constant 0 : i32
    return %arg0, %c0_i32 : i32, i32
  }
  func.func @transform_1(%arg0: i32) -> (i32, i32) {
    %c0_i32 = arith.constant 0 : i32
    %c0_i32_0 = arith.constant 0 : i32
    %c0_i32_1 = arith.constant 0 : i32
    return %c0_i32, %c0_i32_0 : i32, i32
  }
  func.func @transform_2(%arg0: i32) -> (i32, i32) {
    %c0_i32 = arith.constant 0 : i32
    %c0_i32_0 = arith.constant 0 : i32
    %c0_i32_1 = arith.constant 0 : i32
    return %c0_i32, %c0_i32_0 : i32, i32
  }
  func.func @transform_3(%arg0: i32) -> (i32, i32) {
    %c0_i32 = arith.constant 0 : i32
    %c0_i32_0 = arith.constant 0 : i32
    return %arg0, %c0_i32 : i32, i32
  }
  func.func @transform_4(%arg0: i32) -> (i32, i32) {
    %c0_i32 = arith.constant 0 : i32
    %c0_i32_0 = arith.constant 0 : i32
    return %arg0, %c0_i32 : i32, i32
  }
  func.func @transform_5(%arg0: i32) -> (i32, i32) {
    %c0_i32 = arith.constant 0 : i32
    %c0_i32_0 = arith.constant 0 : i32
    return %arg0, %c0_i32 : i32, i32
  }
}

</mosaic_0001>

<llo_original>
// kernel: tpu_custom_call.1
$region0: #{tpu_custom_call.1}
  #allocation0 [shape = 'u32[]', space=smem, size = 0x4, offset = 0x4, fixed_abs, tag = 'smem constant byte address 0x4 - core index']
  #allocation1 [shape = 'u32[144,128]{1,0:T(1,128)}', space=vmem, size = 0x12000, scoped, tag = 'internal scratch']
  %s0 = inlined_call_operand.hbm [shape: f32[16,256], index: 0, kind: input, shape index: {}]
  %s1 = inlined_call_operand.hbm [shape: bf16[256,768], index: 1, kind: input, shape index: {}]
  %s2 = inlined_call_operand.hbm [shape: f32[1,768], index: 2, kind: input, shape index: {}]
  %s3 = inlined_call_operand.hbm [shape: bf16[16,256], index: 3, kind: output, shape index: {0}]
  %s4 = inlined_call_operand.hbm [shape: bf16[16,256], index: 4, kind: output, shape index: {1}]
  %s5 = inlined_call_operand.hbm [shape: bf16[16,256], index: 5, kind: output, shape index: {2}]
  %6 = xla_tuple %s3, %s4, %s5
  %s7 = sld [smem:[#allocation0]]
  $region50: #{tpu_custom_call.1} parent=0
    _
  %s9 = ssub.s32 1, %s7
  %s10 = scalar_select 0, %s9, %s7
  $region1: #{tpu_custom_call.1} parent=0
    #allocation2 [shape = 'u8[16384]{0}', space=vmem, size = 0x4000, scoped, tag = 'input window, operand 0, single buffered']
    #allocation3 [shape = 's32[1]{0}', space=sflag, size = 0x4, scoped, tag = 'scoped memory for tpu_custom_call.1']
    #allocation4 [shape = 's32[1]{0}', space=sflag, size = 0x4, scoped, tag = 'scoped memory for tpu_custom_call.1']
    #allocation5 [shape = 'u8[393216]{0}', space=vmem, size = 0x60000, scoped, tag = 'input window, operand 1, single buffered']
    #allocation6 [shape = 's32[1]{0}', space=sflag, size = 0x4, scoped, tag = 'scoped memory for tpu_custom_call.1']
    #allocation7 [shape = 'u8[3072]{0}', space=vmem, size = 0xc00, scoped, tag = 'input window, operand 2, single buffered']
    #allocation8 [shape = 'u8[8192]{0}', space=vmem, size = 0x2000, scoped, tag = 'output window, operand 0, single buffered']
    #allocation9 [shape = 'u8[8192]{0}', space=vmem, size = 0x2000, scoped, tag = 'output window, operand 1, single buffered']
    #allocation10 [shape = 's32[1]{0}', space=sflag, size = 0x4, scoped, tag = 'scoped memory for tpu_custom_call.1']
    #allocation11 [shape = 'u8[8192]{0}', space=vmem, size = 0x2000, scoped, tag = 'output window, operand 2, single buffered']
    %11 = vsyncpa [#allocation3], 0
    %12 = vsyncpa [#allocation6], 0
    %13 = vsyncpa [#allocation4], 0
    %14 = vsyncpa [#allocation10], 0
    // Predicated region
    $region2: #{tpu_custom_call.1} parent=1 // pred_check
      _
    $region3: #{tpu_custom_call.1} parent=1 // pred_check_branch
      %16 = sbr.rel (0) target = $region5
    $region4: #{tpu_custom_call.1} parent=1 // pred_region
      %s18 = ssub.s32 512, 512
      %19 = vsyncadd [#allocation3], %s18
      %s20 = sshll.u32 [#allocation2], 4
      %s21 = int_to_ptr.vmem [resolvable:$true] %s20
      %26 = dma.hbm_to_vmem [thread:$0]  %s0, 512, %s21, [#allocation3], 256, 256, 16
    $region5: #{tpu_custom_call.1} parent=1 // pred_fallthru
      _
    // Predicated region
    $region6: #{tpu_custom_call.1} parent=1 // pred_check
      _
    $region7: #{tpu_custom_call.1} parent=1 // pred_check_branch
      %28 = sbr.rel (0) target = $region9
    $region8: #{tpu_custom_call.1} parent=1 // pred_region
      %s30 = ssub.s32 12288, 12288
      %31 = vsyncadd [#allocation6], %s30
      %s32 = sshll.u32 [#allocation5], 4
      %s33 = int_to_ptr.vmem [resolvable:$true] %s32
      %38 = dma.hbm_to_vmem [thread:$0]  %s1, 12288, %s33, [#allocation6], 384, 384, 24
    $region9: #{tpu_custom_call.1} parent=1 // pred_fallthru
      _
    // Predicated region
    $region10: #{tpu_custom_call.1} parent=1 // pred_check
      _
    $region11: #{tpu_custom_call.1} parent=1 // pred_check_branch
      %40 = sbr.rel (0) target = $region13
    $region12: #{tpu_custom_call.1} parent=1 // pred_region
      %s42 = ssub.s32 96, 96
      %43 = vsyncadd [#allocation6], %s42
      %s45 = sshll.u32 [#allocation7], 4
      %s46 = int_to_ptr.vmem [resolvable:$true] %s45
      %48 = dma.hbm_to_vmem [thread:$0]  %s2, 96, %s46, [#allocation6]
    $region13: #{tpu_custom_call.1} parent=1 // pred_fallthru
      _
    // Predicated region
    $region14: #{tpu_custom_call.1} parent=1 // pred_check
      _
    $region15: #{tpu_custom_call.1} parent=1 // pred_check_branch
      %50 = sbr.rel (0) target = $region17
    $region16: #{tpu_custom_call.1} parent=1 // pred_region
      %51 = dma.done [#allocation3], 512
    $region17: #{tpu_custom_call.1} parent=1 // pred_fallthru
      _
    // Predicated region
    $region18: #{tpu_custom_call.1} parent=1 // pred_check
      _
    $region19: #{tpu_custom_call.1} parent=1 // pred_check_branch
      %53 = sbr.rel (0) target = $region21
    $region20: #{tpu_custom_call.1} parent=1 // pred_region
      %54 = dma.done [#allocation6], 12288
    $region21: #{tpu_custom_call.1} parent=1 // pred_fallthru
      _
    // Predicated region
    $region22: #{tpu_custom_call.1} parent=1 // pred_check
      _
    $region23: #{tpu_custom_call.1} parent=1 // pred_check_branch
      %56 = sbr.rel (0) target = $region25
    $region24: #{tpu_custom_call.1} parent=1 // pred_region
      %57 = dma.done [#allocation6], 96
    $region25: #{tpu_custom_call.1} parent=1 // pred_fallthru
      _
    %v58 = vld [vmem:[#allocation2] sm:$0xff]
    %v59 = vld [vmem:[#allocation2 + $0x8] sm:$0xff]
    %v60 = vld [vmem:[#allocation2 + $0x10] sm:$0xff]
    %v61 = vld [vmem:[#allocation2 + $0x18] sm:$0xff]
    %v62 = vpack.c.bf16 %v60, %v58
    %v63 = vpack.c.bf16 %v61, %v59
    %v64 = vld [vmem:[#allocation5] sm:$0xff]
    %v65 = vld [vmem:[#allocation5 + $0x8] sm:$0xff]
    %v66 = vld [vmem:[#allocation5 + $0x10] sm:$0xff]
    %v67 = vld [vmem:[#allocation5 + $0x18] sm:$0xff]
    %v68 = vld [vmem:[#allocation5 + $0x20] sm:$0xff]
    %v69 = vld [vmem:[#allocation5 + $0x28] sm:$0xff]
    %v70 = vld [vmem:[#allocation5 + $0x30] sm:$0xff]
    %v71 = vld [vmem:[#allocation5 + $0x38] sm:$0xff]
    %v72 = vld [vmem:[#allocation5 + $0x40] sm:$0xff]
    %v73 = vld [vmem:[#allocation5 + $0x48] sm:$0xff]
    %v74 = vld [vmem:[#allocation5 + $0x50] sm:$0xff]
    %v75 = vld [vmem:[#allocation5 + $0x58] sm:$0xff]
    %v76 = vld [vmem:[#allocation5 + $0x60] sm:$0xff]
    %v77 = vld [vmem:[#allocation5 + $0x68] sm:$0xff]
    %v78 = vld [vmem:[#allocation5 + $0x70] sm:$0xff]
    %v79 = vld [vmem:[#allocation5 + $0x78] sm:$0xff]
    %v80 = vld [vmem:[#allocation5 + $0x80] sm:$0xff]
    %v81 = vld [vmem:[#allocation5 + $0x88] sm:$0xff]
    %v82 = vld [vmem:[#allocation5 + $0x90] sm:$0xff]
    %v83 = vld [vmem:[#allocation5 + $0x98] sm:$0xff]
    %v84 = vld [vmem:[#allocation5 + $0xa0] sm:$0xff]
    %v85 = vld [vmem:[#allocation5 + $0xa8] sm:$0xff]
    %v86 = vld [vmem:[#allocation5 + $0xb0] sm:$0xff]
    %v87 = vld [vmem:[#allocation5 + $0xb8] sm:$0xff]
    %v88 = vld [vmem:[#allocation5 + $0xc0] sm:$0xff]
    %v89 = vld [vmem:[#allocation5 + $0xc8] sm:$0xff]
    %v90 = vld [vmem:[#allocation5 + $0xd0] sm:$0xff]
    %v91 = vld [vmem:[#allocation5 + $0xd8] sm:$0xff]
    %v92 = vld [vmem:[#allocation5 + $0xe0] sm:$0xff]
    %v93 = vld [vmem:[#allocation5 + $0xe8] sm:$0xff]
    %v94 = vld [vmem:[#allocation5 + $0xf0] sm:$0xff]
    %v95 = vld [vmem:[#allocation5 + $0xf8] sm:$0xff]
    %v96 = vld [vmem:[#allocation5 + $0x100] sm:$0xff]
    %v97 = vld [vmem:[#allocation5 + $0x108] sm:$0xff]
    %v98 = vld [vmem:[#allocation5 + $0x110] sm:$0xff]
    %v99 = vld [vmem:[#allocation5 + $0x118] sm:$0xff]
    %v100 = vld [vmem:[#allocation5 + $0x120] sm:$0xff]
    %v101 = vld [vmem:[#allocation5 + $0x128] sm:$0xff]
    %v102 = vld [vmem:[#allocation5 + $0x130] sm:$0xff]
    %v103 = vld [vmem:[#allocation5 + $0x138] sm:$0xff]
    %v104 = vld [vmem:[#allocation5 + $0x140] sm:$0xff]
    %v105 = vld [vmem:[#allocation5 + $0x148] sm:$0xff]
    %v106 = vld [vmem:[#allocation5 + $0x150] sm:$0xff]
    %v107 = vld [vmem:[#allocation5 + $0x158] sm:$0xff]
    %v108 = vld [vmem:[#allocation5 + $0x160] sm:$0xff]
    %v109 = vld [vmem:[#allocation5 + $0x168] sm:$0xff]
    %v110 = vld [vmem:[#allocation5 + $0x170] sm:$0xff]
    %v111 = vld [vmem:[#allocation5 + $0x178] sm:$0xff]
    %v112 = vld [vmem:[#allocation5 + $0x180] sm:$0xff]
    %v113 = vld [vmem:[#allocation5 + $0x188] sm:$0xff]
    %v114 = vld [vmem:[#allocation5 + $0x190] sm:$0xff]
    %v115 = vld [vmem:[#allocation5 + $0x198] sm:$0xff]
    %v116 = vld [vmem:[#allocation5 + $0x1a0] sm:$0xff]
    %v117 = vld [vmem:[#allocation5 + $0x1a8] sm:$0xff]
    %v118 = vld [vmem:[#allocation5 + $0x1b0] sm:$0xff]
    %v119 = vld [vmem:[#allocation5 + $0x1b8] sm:$0xff]
    %v120 = vld [vmem:[#allocation5 + $0x1c0] sm:$0xff]
    %v121 = vld [vmem:[#allocation5 + $0x1c8] sm:$0xff]
    %v122 = vld [vmem:[#allocation5 + $0x1d0] sm:$0xff]
    %v123 = vld [vmem:[#allocation5 + $0x1d8] sm:$0xff]
    %v124 = vld [vmem:[#allocation5 + $0x1e0] sm:$0xff]
    %v125 = vld [vmem:[#allocation5 + $0x1e8] sm:$0xff]
    %v126 = vld [vmem:[#allocation5 + $0x1f0] sm:$0xff]
    %v127 = vld [vmem:[#allocation5 + $0x1f8] sm:$0xff]
    %v128 = vld [vmem:[#allocation5 + $0x200] sm:$0xff]
    %v129 = vld [vmem:[#allocation5 + $0x208] sm:$0xff]
    %v130 = vld [vmem:[#allocation5 + $0x210] sm:$0xff]
    %v131 = vld [vmem:[#allocation5 + $0x218] sm:$0xff]
    %v132 = vld [vmem:[#allocation5 + $0x220] sm:$0xff]
    %v133 = vld [vmem:[#allocation5 + $0x228] sm:$0xff]
    %v134 = vld [vmem:[#allocation5 + $0x230] sm:$0xff]
    %v135 = vld [vmem:[#allocation5 + $0x238] sm:$0xff]
    %v136 = vld [vmem:[#allocation5 + $0x240] sm:$0xff]
    %v137 = vld [vmem:[#allocation5 + $0x248] sm:$0xff]
    %v138 = vld [vmem:[#allocation5 + $0x250] sm:$0xff]
    %v139 = vld [vmem:[#allocation5 + $0x258] sm:$0xff]
    %v140 = vld [vmem:[#allocation5 + $0x260] sm:$0xff]
    %v141 = vld [vmem:[#allocation5 + $0x268] sm:$0xff]
    %v142 = vld [vmem:[#allocation5 + $0x270] sm:$0xff]
    %v143 = vld [vmem:[#allocation5 + $0x278] sm:$0xff]
    %v144 = vld [vmem:[#allocation5 + $0x280] sm:$0xff]
    %v145 = vld [vmem:[#allocation5 + $0x288] sm:$0xff]
    %v146 = vld [vmem:[#allocation5 + $0x290] sm:$0xff]
    %v147 = vld [vmem:[#allocation5 + $0x298] sm:$0xff]
    %v148 = vld [vmem:[#allocation5 + $0x2a0] sm:$0xff]
    %v149 = vld [vmem:[#allocation5 + $0x2a8] sm:$0xff]
    %v150 = vld [vmem:[#allocation5 + $0x2b0] sm:$0xff]
    %v151 = vld [vmem:[#allocation5 + $0x2b8] sm:$0xff]
    %v152 = vld [vmem:[#allocation5 + $0x2c0] sm:$0xff]
    %v153 = vld [vmem:[#allocation5 + $0x2c8] sm:$0xff]
    %v154 = vld [vmem:[#allocation5 + $0x2d0] sm:$0xff]
    %v155 = vld [vmem:[#allocation5 + $0x2d8] sm:$0xff]
    %v156 = vld [vmem:[#allocation5 + $0x2e0] sm:$0xff]
    %v157 = vld [vmem:[#allocation5 + $0x2e8] sm:$0xff]
    %v158 = vld [vmem:[#allocation5 + $0x2f0] sm:$0xff]
    %v159 = vld [vmem:[#allocation5 + $0x2f8] sm:$0xff]
    %v160 = vld [vmem:[#allocation7] sm:$0x3f]
    %v162 = vlaneseq
    %v163 = vshrl.u32 %v162, 7
    %v164 = vsub.s32 0, %v163
    %v165 = vrot.slane %v160, %v164
    %v166 = vlaneseq
    %v167 = vshrl.u32 %v166, 7
    %v168 = vsub.s32 1, %v167
    %v169 = vrot.slane %v160, %v168
    %v170 = vlaneseq
    %v171 = vshrl.u32 %v170, 7
    %v172 = vsub.s32 2, %v171
    %v173 = vrot.slane %v160, %v172
    %v174 = vlaneseq
    %v175 = vshrl.u32 %v174, 7
    %v176 = vsub.s32 3, %v175
    %v177 = vrot.slane %v160, %v176
    %v178 = vlaneseq
    %v179 = vshrl.u32 %v178, 7
    %v180 = vsub.s32 4, %v179
    %v181 = vrot.slane %v160, %v180
    %v182 = vlaneseq
    %v183 = vshrl.u32 %v182, 7
    %v184 = vsub.s32 5, %v183
    %v185 = vrot.slane %v160, %v184
    %v288 = vunpack.c.l.b16 %v64
    %v289 = vunpack.c.h.b16 %v64
    %v290 = vunpack.c.l.b16 %v65
    %v291 = vunpack.c.h.b16 %v65
    %v292 = vunpack.c.l.b16 %v66
    %v293 = vunpack.c.h.b16 %v66
    %v294 = vunpack.c.l.b16 %v67
    %v295 = vunpack.c.h.b16 %v67
    %v296 = vunpack.c.l.b16 %v68
    %v297 = vunpack.c.h.b16 %v68
    %v298 = vunpack.c.l.b16 %v69
    %v299 = vunpack.c.h.b16 %v69
    %v300 = vunpack.c.l.b16 %v70
    %v301 = vunpack.c.h.b16 %v70
    %v302 = vunpack.c.l.b16 %v71
    %v303 = vunpack.c.h.b16 %v71
    %v304 = vunpack.c.l.b16 %v72
    %v305 = vunpack.c.h.b16 %v72
    %v306 = vunpack.c.l.b16 %v73
    %v307 = vunpack.c.h.b16 %v73
    %v308 = vunpack.c.l.b16 %v74
    %v309 = vunpack.c.h.b16 %v74
    %v310 = vunpack.c.l.b16 %v75
    %v311 = vunpack.c.h.b16 %v75
    %v312 = vunpack.c.l.b16 %v76
    %v313 = vunpack.c.h.b16 %v76
    %v314 = vunpack.c.l.b16 %v77
    %v315 = vunpack.c.h.b16 %v77
    %v316 = vunpack.c.l.b16 %v78
    %v317 = vunpack.c.h.b16 %v78
    %v318 = vunpack.c.l.b16 %v79
    %v319 = vunpack.c.h.b16 %v79
    %v320 = vunpack.c.l.b16 %v80
    %v321 = vunpack.c.h.b16 %v80
    %v322 = vunpack.c.l.b16 %v81
    %v323 = vunpack.c.h.b16 %v81
    %v324 = vunpack.c.l.b16 %v82
    %v325 = vunpack.c.h.b16 %v82
    %v326 = vunpack.c.l.b16 %v83
    %v327 = vunpack.c.h.b16 %v83
    %v328 = vunpack.c.l.b16 %v84
    %v329 = vunpack.c.h.b16 %v84
    %v330 = vunpack.c.l.b16 %v85
    %v331 = vunpack.c.h.b16 %v85
    %v332 = vunpack.c.l.b16 %v86
    %v333 = vunpack.c.h.b16 %v86
    %v334 = vunpack.c.l.b16 %v87
    %v335 = vunpack.c.h.b16 %v87
    %v336 = vunpack.c.l.b16 %v88
    %v337 = vunpack.c.h.b16 %v88
    %v338 = vunpack.c.l.b16 %v89
    %v339 = vunpack.c.h.b16 %v89
    %v340 = vunpack.c.l.b16 %v90
    %v341 = vunpack.c.h.b16 %v90
    %v342 = vunpack.c.l.b16 %v91
    %v343 = vunpack.c.h.b16 %v91
    %v344 = vunpack.c.l.b16 %v92
    %v345 = vunpack.c.h.b16 %v92
    %v346 = vunpack.c.l.b16 %v93
    %v347 = vunpack.c.h.b16 %v93
    %v348 = vunpack.c.l.b16 %v94
    %v349 = vunpack.c.h.b16 %v94
    %v350 = vunpack.c.l.b16 %v95
    %v351 = vunpack.c.h.b16 %v95
    %v352 = vunpack.c.l.b16 %v96
    %v353 = vunpack.c.h.b16 %v96
    %v354 = vunpack.c.l.b16 %v97
    %v355 = vunpack.c.h.b16 %v97
    %v356 = vunpack.c.l.b16 %v98
    %v357 = vunpack.c.h.b16 %v98
    %v358 = vunpack.c.l.b16 %v99
    %v359 = vunpack.c.h.b16 %v99
    %v360 = vunpack.c.l.b16 %v100
    %v361 = vunpack.c.h.b16 %v100
    %v362 = vunpack.c.l.b16 %v101
    %v363 = vunpack.c.h.b16 %v101
    %v364 = vunpack.c.l.b16 %v102
    %v365 = vunpack.c.h.b16 %v102
    %v366 = vunpack.c.l.b16 %v103
    %v367 = vunpack.c.h.b16 %v103
    %v368 = vunpack.c.l.b16 %v104
    %v369 = vunpack.c.h.b16 %v104
    %v370 = vunpack.c.l.b16 %v105
    %v371 = vunpack.c.h.b16 %v105
    %v372 = vunpack.c.l.b16 %v106
    %v373 = vunpack.c.h.b16 %v106
    %v374 = vunpack.c.l.b16 %v107
    %v375 = vunpack.c.h.b16 %v107
    %v376 = vunpack.c.l.b16 %v108
    %v377 = vunpack.c.h.b16 %v108
    %v378 = vunpack.c.l.b16 %v109
    %v379 = vunpack.c.h.b16 %v109
    %v380 = vunpack.c.l.b16 %v110
    %v381 = vunpack.c.h.b16 %v110
    %v382 = vunpack.c.l.b16 %v111
    %v383 = vunpack.c.h.b16 %v111
    %v384 = vunpack.c.l.b16 %v112
    %v385 = vunpack.c.h.b16 %v112
    %v386 = vunpack.c.l.b16 %v113
    %v387 = vunpack.c.h.b16 %v113
    %v388 = vunpack.c.l.b16 %v114
    %v389 = vunpack.c.h.b16 %v114
    %v390 = vunpack.c.l.b16 %v115
    %v391 = vunpack.c.h.b16 %v115
    %v392 = vunpack.c.l.b16 %v116
    %v393 = vunpack.c.h.b16 %v116
    %v394 = vunpack.c.l.b16 %v117
    %v395 = vunpack.c.h.b16 %v117
    %v396 = vunpack.c.l.b16 %v118
    %v397 = vunpack.c.h.b16 %v118
    %v398 = vunpack.c.l.b16 %v119
    %v399 = vunpack.c.h.b16 %v119
    %v400 = vunpack.c.l.b16 %v120
    %v401 = vunpack.c.h.b16 %v120
    %v402 = vunpack.c.l.b16 %v121
    %v403 = vunpack.c.h.b16 %v121
    %v404 = vunpack.c.l.b16 %v122
    %v405 = vunpack.c.h.b16 %v122
    %v406 = vunpack.c.l.b16 %v123
    %v407 = vunpack.c.h.b16 %v123
    %v408 = vunpack.c.l.b16 %v124
    %v409 = vunpack.c.h.b16 %v124
    %v410 = vunpack.c.l.b16 %v125
    %v411 = vunpack.c.h.b16 %v125
    %v412 = vunpack.c.l.b16 %v126
    %v413 = vunpack.c.h.b16 %v126
    %v414 = vunpack.c.l.b16 %v127
    %v415 = vunpack.c.h.b16 %v127
    %v416 = vunpack.c.l.b16 %v128
    %v417 = vunpack.c.h.b16 %v128
    %v418 = vunpack.c.l.b16 %v129
    %v419 = vunpack.c.h.b16 %v129
    %v420 = vunpack.c.l.b16 %v130
    %v421 = vunpack.c.h.b16 %v130
    %v422 = vunpack.c.l.b16 %v131
    %v423 = vunpack.c.h.b16 %v131
    %v424 = vunpack.c.l.b16 %v132
    %v425 = vunpack.c.h.b16 %v132
    %v426 = vunpack.c.l.b16 %v133
    %v427 = vunpack.c.h.b16 %v133
    %v428 = vunpack.c.l.b16 %v134
    %v429 = vunpack.c.h.b16 %v134
    %v430 = vunpack.c.l.b16 %v135
    %v431 = vunpack.c.h.b16 %v135
    %v432 = vunpack.c.l.b16 %v136
    %v433 = vunpack.c.h.b16 %v136
    %v434 = vunpack.c.l.b16 %v137
    %v435 = vunpack.c.h.b16 %v137
    %v436 = vunpack.c.l.b16 %v138
    %v437 = vunpack.c.h.b16 %v138
    %v438 = vunpack.c.l.b16 %v139
    %v439 = vunpack.c.h.b16 %v139
    %v440 = vunpack.c.l.b16 %v140
    %v441 = vunpack.c.h.b16 %v140
    %v442 = vunpack.c.l.b16 %v141
    %v443 = vunpack.c.h.b16 %v141
    %v444 = vunpack.c.l.b16 %v142
    %v445 = vunpack.c.h.b16 %v142
    %v446 = vunpack.c.l.b16 %v143
    %v447 = vunpack.c.h.b16 %v143
    %v448 = vunpack.c.l.b16 %v144
    %v449 = vunpack.c.h.b16 %v144
    %v450 = vunpack.c.l.b16 %v145
    %v451 = vunpack.c.h.b16 %v145
    %v452 = vunpack.c.l.b16 %v146
    %v453 = vunpack.c.h.b16 %v146
    %v454 = vunpack.c.l.b16 %v147
    %v455 = vunpack.c.h.b16 %v147
    %v456 = vunpack.c.l.b16 %v148
    %v457 = vunpack.c.h.b16 %v148
    %v458 = vunpack.c.l.b16 %v149
    %v459 = vunpack.c.h.b16 %v149
    %v460 = vunpack.c.l.b16 %v150
    %v461 = vunpack.c.h.b16 %v150
    %v462 = vunpack.c.l.b16 %v151
    %v463 = vunpack.c.h.b16 %v151
    %v464 = vunpack.c.l.b16 %v152
    %v465 = vunpack.c.h.b16 %v152
    %v466 = vunpack.c.l.b16 %v153
    %v467 = vunpack.c.h.b16 %v153
    %v468 = vunpack.c.l.b16 %v154
    %v469 = vunpack.c.h.b16 %v154
    %v470 = vunpack.c.l.b16 %v155
    %v471 = vunpack.c.h.b16 %v155
    %v472 = vunpack.c.l.b16 %v156
    %v473 = vunpack.c.h.b16 %v156
    %v474 = vunpack.c.l.b16 %v157
    %v475 = vunpack.c.h.b16 %v157
    %v476 = vunpack.c.l.b16 %v158
    %v477 = vunpack.c.h.b16 %v158
    %v478 = vunpack.c.l.b16 %v159
    %v479 = vunpack.c.h.b16 %v159
    %v480 = vpack.c.b16 %v294, %v288
    %v481 = vpack.c.b16 %v295, %v289
    %v482 = vpack.c.b16 %v296, %v290
    %v483 = vpack.c.b16 %v297, %v291
    %v484 = vpack.c.b16 %v298, %v292
    %v485 = vpack.c.b16 %v299, %v293
    %v486 = vpack.c.b16 %v306, %v300
    %v487 = vpack.c.b16 %v307, %v301
    %v488 = vpack.c.b16 %v308, %v302
    %v489 = vpack.c.b16 %v309, %v303
    %v490 = vpack.c.b16 %v310, %v304
    %v491 = vpack.c.b16 %v311, %v305
    %v492 = vpack.c.b16 %v318, %v312
    %v493 = vpack.c.b16 %v319, %v313
    %v494 = vpack.c.b16 %v320, %v314
    %v495 = vpack.c.b16 %v321, %v315
    %v496 = vpack.c.b16 %v322, %v316
    %v497 = vpack.c.b16 %v323, %v317
    %v498 = vpack.c.b16 %v330, %v324
    %v499 = vpack.c.b16 %v331, %v325
    %v500 = vpack.c.b16 %v332, %v326
    %v501 = vpack.c.b16 %v333, %v327
    %v502 = vpack.c.b16 %v334, %v328
    %v503 = vpack.c.b16 %v335, %v329
    %v504 = vpack.c.b16 %v342, %v336
    %v505 = vpack.c.b16 %v343, %v337
    %v506 = vpack.c.b16 %v344, %v338
    %v507 = vpack.c.b16 %v345, %v339
    %v508 = vpack.c.b16 %v346, %v340
    %v509 = vpack.c.b16 %v347, %v341
    %v510 = vpack.c.b16 %v354, %v348
    %v511 = vpack.c.b16 %v355, %v349
    %v512 = vpack.c.b16 %v356, %v350
    %v513 = vpack.c.b16 %v357, %v351
    %v514 = vpack.c.b16 %v358, %v352
    %v515 = vpack.c.b16 %v359, %v353
    %v516 = vpack.c.b16 %v366, %v360
    %v517 = vpack.c.b16 %v367, %v361
    %v518 = vpack.c.b16 %v368, %v362
    %v519 = vpack.c.b16 %v369, %v363
    %v520 = vpack.c.b16 %v370, %v364
    %v521 = vpack.c.b16 %v371, %v365
    %v522 = vpack.c.b16 %v378, %v372
    %v523 = vpack.c.b16 %v379, %v373
    %v524 = vpack.c.b16 %v380, %v374
    %v525 = vpack.c.b16 %v381, %v375
    %v526 = vpack.c.b16 %v382, %v376
    %v527 = vpack.c.b16 %v383, %v377
    %v528 = vpack.c.b16 %v390, %v384
    %v529 = vpack.c.b16 %v391, %v385
    %v530 = vpack.c.b16 %v392, %v386
    %v531 = vpack.c.b16 %v393, %v387
    %v532 = vpack.c.b16 %v394, %v388
    %v533 = vpack.c.b16 %v395, %v389
    %v534 = vpack.c.b16 %v402, %v396
    %v535 = vpack.c.b16 %v403, %v397
    %v536 = vpack.c.b16 %v404, %v398
    %v537 = vpack.c.b16 %v405, %v399
    %v538 = vpack.c.b16 %v406, %v400
    %v539 = vpack.c.b16 %v407, %v401
    %v540 = vpack.c.b16 %v414, %v408
    %v541 = vpack.c.b16 %v415, %v409
    %v542 = vpack.c.b16 %v416, %v410
    %v543 = vpack.c.b16 %v417, %v411
    %v544 = vpack.c.b16 %v418, %v412
    %v545 = vpack.c.b16 %v419, %v413
    %v546 = vpack.c.b16 %v426, %v420
    %v547 = vpack.c.b16 %v427, %v421
    %v548 = vpack.c.b16 %v428, %v422
    %v549 = vpack.c.b16 %v429, %v423
    %v550 = vpack.c.b16 %v430, %v424
    %v551 = vpack.c.b16 %v431, %v425
    %v552 = vpack.c.b16 %v438, %v432
    %v553 = vpack.c.b16 %v439, %v433
    %v554 = vpack.c.b16 %v440, %v434
    %v555 = vpack.c.b16 %v441, %v435
    %v556 = vpack.c.b16 %v442, %v436
    %v557 = vpack.c.b16 %v443, %v437
    %v558 = vpack.c.b16 %v450, %v444
    %v559 = vpack.c.b16 %v451, %v445
    %v560 = vpack.c.b16 %v452, %v446
    %v561 = vpack.c.b16 %v453, %v447
    %v562 = vpack.c.b16 %v454, %v448
    %v563 = vpack.c.b16 %v455, %v449
    %v564 = vpack.c.b16 %v462, %v456
    %v565 = vpack.c.b16 %v463, %v457
    %v566 = vpack.c.b16 %v464, %v458
    %v567 = vpack.c.b16 %v465, %v459
    %v568 = vpack.c.b16 %v466, %v460
    %v569 = vpack.c.b16 %v467, %v461
    %v570 = vpack.c.b16 %v474, %v468
    %v571 = vpack.c.b16 %v475, %v469
    %v572 = vpack.c.b16 %v476, %v470
    %v573 = vpack.c.b16 %v477, %v471
    %v574 = vpack.c.b16 %v478, %v472
    %v575 = vpack.c.b16 %v479, %v473
    %672 = vmatprep.subr.bf16.mxu0 %v523
    %673 = vmatpush1.bf16.msra.mxu0 %v522
    %674 = vmatprep.subr.bf16.mxu0 %v517
    %675 = vmatpush1.bf16.msra.mxu0 %v516
    %676 = vmatprep.subr.bf16.mxu0 %v511
    %677 = vmatpush1.bf16.msra.mxu0 %v510
    %678 = vmatprep.subr.bf16.mxu0 %v505
    %679 = vmatpush1.bf16.msra.mxu0 %v504
    %680 = vmatprep.subr.bf16.mxu0 %v499
    %681 = vmatpush1.bf16.msra.mxu0 %v498
    %682 = vmatprep.subr.bf16.mxu0 %v493
    %683 = vmatpush1.bf16.msra.mxu0 %v492
    %684 = vmatprep.subr.bf16.mxu0 %v487
    %685 = vmatpush1.bf16.msra.mxu0 %v486
    %686 = vmatprep.subr.bf16.mxu0 %v481
    %687 = vmatpush1.bf16.msra.mxu0 %v480
    %688 = vmatprep.subr.bf16.mxu0 %v571
    %689 = vmatpush2.bf16.msra.mxu0 %v570
    %690 = vmatprep.subr.bf16.mxu0 %v565
    %691 = vmatpush2.bf16.msra.mxu0 %v564
    %692 = vmatprep.subr.bf16.mxu0 %v559
    %693 = vmatpush2.bf16.msra.mxu0 %v558
    %694 = vmatprep.subr.bf16.mxu0 %v553
    %695 = vmatpush2.bf16.msra.mxu0 %v552
    %696 = vmatprep.subr.bf16.mxu0 %v547
    %697 = vmatpush2.bf16.msra.mxu0 %v546
    %698 = vmatprep.subr.bf16.mxu0 %v541
    %699 = vmatpush2.bf16.msra.mxu0 %v540
    %700 = vmatprep.subr.bf16.mxu0 %v535
    %701 = vmatpush2.bf16.msra.mxu0 %v534
    %702 = vmatprep.subr.bf16.mxu0 %v529
    %703 = vmatpush2.bf16.msra.mxu0 %v528
    %704 = vmatprep.mubr.bf16.mxu0 %v63
    %705 = vmatmul.mubr.bf16.gmra.mxu0 %v62
    %v706 = vpop.f32.mrf.mxu0
    %v707 = vadd.f32 %v165, %v706
    %v708 = vpop.f32.mrf.mxu0
    %v709 = vadd.f32 %v169, %v708
    %v710 = vpop.f32.mrf.mxu0
    %v711 = vadd.f32 %v165, %v710
    %v712 = vpop.f32.mrf.mxu0
    %v713 = vadd.f32 %v169, %v712
    %714 = vdwg.mxu0
    %715 = vmatprep.subr.bf16.mxu0 %v525
    %716 = vmatpush1.bf16.msra.mxu0 %v524
    %717 = vmatprep.subr.bf16.mxu0 %v519
    %718 = vmatpush1.bf16.msra.mxu0 %v518
    %719 = vmatprep.subr.bf16.mxu0 %v513
    %720 = vmatpush1.bf16.msra.mxu0 %v512
    %721 = vmatprep.subr.bf16.mxu0 %v507
    %722 = vmatpush1.bf16.msra.mxu0 %v506
    %723 = vmatprep.subr.bf16.mxu0 %v501
    %724 = vmatpush1.bf16.msra.mxu0 %v500
    %725 = vmatprep.subr.bf16.mxu0 %v495
    %726 = vmatpush1.bf16.msra.mxu0 %v494
    %727 = vmatprep.subr.bf16.mxu0 %v489
    %728 = vmatpush1.bf16.msra.mxu0 %v488
    %729 = vmatprep.subr.bf16.mxu0 %v483
    %730 = vmatpush1.bf16.msra.mxu0 %v482
    %731 = vmatprep.subr.bf16.mxu0 %v573
    %732 = vmatpush2.bf16.msra.mxu0 %v572
    %733 = vmatprep.subr.bf16.mxu0 %v567
    %734 = vmatpush2.bf16.msra.mxu0 %v566
    %735 = vmatprep.subr.bf16.mxu0 %v561
    %736 = vmatpush2.bf16.msra.mxu0 %v560
    %737 = vmatprep.subr.bf16.mxu0 %v555
    %738 = vmatpush2.bf16.msra.mxu0 %v554
    %739 = vmatprep.subr.bf16.mxu0 %v549
    %740 = vmatpush2.bf16.msra.mxu0 %v548
    %741 = vmatprep.subr.bf16.mxu0 %v543
    %742 = vmatpush2.bf16.msra.mxu0 %v542
    %743 = vmatprep.subr.bf16.mxu0 %v537
    %744 = vmatpush2.bf16.msra.mxu0 %v536
    %745 = vmatprep.subr.bf16.mxu0 %v531
    %746 = vmatpush2.bf16.msra.mxu0 %v530
    %747 = vmatprep.mubr.bf16.mxu0 %v63
    %748 = vmatmul.mubr.bf16.gmra.mxu0 %v62
    %v749 = vpop.f32.mrf.mxu0
    %v750 = vadd.f32 %v173, %v749
    %v751 = vpop.f32.mrf.mxu0
    %v752 = vadd.f32 %v177, %v751
    %v753 = vpop.f32.mrf.mxu0
    %v754 = vadd.f32 %v173, %v753
    %v755 = vpop.f32.mrf.mxu0
    %v756 = vadd.f32 %v177, %v755
    %757 = vdwg.mxu0
    %758 = vmatprep.subr.bf16.mxu0 %v527
    %759 = vmatpush1.bf16.msra.mxu0 %v526
    %760 = vmatprep.subr.bf16.mxu0 %v521
    %761 = vmatpush1.bf16.msra.mxu0 %v520
    %762 = vmatprep.subr.bf16.mxu0 %v515
    %763 = vmatpush1.bf16.msra.mxu0 %v514
    %764 = vmatprep.subr.bf16.mxu0 %v509
    %765 = vmatpush1.bf16.msra.mxu0 %v508
    %766 = vmatprep.subr.bf16.mxu0 %v503
    %767 = vmatpush1.bf16.msra.mxu0 %v502
    %768 = vmatprep.subr.bf16.mxu0 %v497
    %769 = vmatpush1.bf16.msra.mxu0 %v496
    %770 = vmatprep.subr.bf16.mxu0 %v491
    %771 = vmatpush1.bf16.msra.mxu0 %v490
    %772 = vmatprep.subr.bf16.mxu0 %v485
    %773 = vmatpush1.bf16.msra.mxu0 %v484
    %774 = vmatprep.subr.bf16.mxu0 %v575
    %775 = vmatpush2.bf16.msra.mxu0 %v574
    %776 = vmatprep.subr.bf16.mxu0 %v569
    %777 = vmatpush2.bf16.msra.mxu0 %v568
    %778 = vmatprep.subr.bf16.mxu0 %v563
    %779 = vmatpush2.bf16.msra.mxu0 %v562
    %780 = vmatprep.subr.bf16.mxu0 %v557
    %781 = vmatpush2.bf16.msra.mxu0 %v556
    %782 = vmatprep.subr.bf16.mxu0 %v551
    %783 = vmatpush2.bf16.msra.mxu0 %v550
    %784 = vmatprep.subr.bf16.mxu0 %v545
    %785 = vmatpush2.bf16.msra.mxu0 %v544
    %786 = vmatprep.subr.bf16.mxu0 %v539
    %787 = vmatpush2.bf16.msra.mxu0 %v538
    %788 = vmatprep.subr.bf16.mxu0 %v533
    %789 = vmatpush2.bf16.msra.mxu0 %v532
    %790 = vmatprep.mubr.bf16.mxu0 %v63
    %791 = vmatmul.mubr.bf16.gmra.mxu0 %v62
    %v792 = vpop.f32.mrf.mxu0
    %v793 = vadd.f32 %v181, %v792
    %v794 = vpop.f32.mrf.mxu0
    %v795 = vadd.f32 %v185, %v794
    %v796 = vpop.f32.mrf.mxu0
    %v797 = vadd.f32 %v181, %v796
    %v798 = vpop.f32.mrf.mxu0
    %v799 = vadd.f32 %v185, %v798
    %800 = vdwg.mxu0
    %v801 = vpack.c.bf16 %v711, %v707
    %v802 = vpack.c.bf16 %v713, %v709
    %v805 = vunpack.c.l.b16 %v801
    %v806 = vunpack.c.l.b16 %v802
    %v807 = vunpack.c.h.b16 %v801
    %v808 = vunpack.c.h.b16 %v802
    %v809 = vpack.c.b16 %v806, %v805
    %v810 = vpack.c.b16 %v808, %v807
    %813 = vst [vmem:[#allocation8] sm:$0xff] %v809
    %814 = vst [vmem:[#allocation8 + $0x8] sm:$0xff] %v810
    %v815 = vpack.c.bf16 %v754, %v750
    %v816 = vpack.c.bf16 %v756, %v752
    %v819 = vunpack.c.l.b16 %v815
    %v820 = vunpack.c.l.b16 %v816
    %v821 = vunpack.c.h.b16 %v815
    %v822 = vunpack.c.h.b16 %v816
    %v823 = vpack.c.b16 %v820, %v819
    %v824 = vpack.c.b16 %v822, %v821
    %827 = vst [vmem:[#allocation9] sm:$0xff] %v823
    %828 = vst [vmem:[#allocation9 + $0x8] sm:$0xff] %v824
    %v829 = vpack.c.bf16 %v797, %v793
    %v830 = vpack.c.bf16 %v799, %v795
    %v833 = vunpack.c.l.b16 %v829
    %v834 = vunpack.c.l.b16 %v830
    %v835 = vunpack.c.h.b16 %v829
    %v836 = vunpack.c.h.b16 %v830
    %v837 = vpack.c.b16 %v834, %v833
    %v838 = vpack.c.b16 %v836, %v835
    %841 = vst [vmem:[#allocation11] sm:$0xff] %v837
    %842 = vst [vmem:[#allocation11 + $0x8] sm:$0xff] %v838
    // Predicated region
    $region26: #{tpu_custom_call.1} parent=1 // pred_check
      _
    $region27: #{tpu_custom_call.1} parent=1 // pred_check_branch
      %844 = sbr.rel (0) target = $region29
    $region28: #{tpu_custom_call.1} parent=1 // pred_region
      %s846 = ssub.s32 256, 256
      %847 = vsyncadd [#allocation4], %s846
      %s848 = sshll.u32 [#allocation8], 4
      %s849 = int_to_ptr.vmem [resolvable:$true] %s848
      %854 = dma.vmem_to_hbm [thread:$0]  %s849, 256, %s3, [#allocation4], 128, 128, 8
    $region29: #{tpu_custom_call.1} parent=1 // pred_fallthru
      _
    // Predicated region
    $region30: #{tpu_custom_call.1} parent=1 // pred_check
      _
    $region31: #{tpu_custom_call.1} parent=1 // pred_check_branch
      %856 = sbr.rel (0) target = $region33
    $region32: #{tpu_custom_call.1} parent=1 // pred_region
      %s858 = ssub.s32 256, 256
      %859 = vsyncadd [#allocation10], %s858
      %s860 = sshll.u32 [#allocation9], 4
      %s861 = int_to_ptr.vmem [resolvable:$true] %s860
      %866 = dma.vmem_to_hbm [thread:$0]  %s861, 256, %s4, [#allocation10], 128, 128, 8
    $region33: #{tpu_custom_call.1} parent=1 // pred_fallthru
      _
    // Predicated region
    $region34: #{tpu_custom_call.1} parent=1 // pred_check
      _
    $region35: #{tpu_custom_call.1} parent=1 // pred_check_branch
      %868 = sbr.rel (0) target = $region37
    $region36: #{tpu_custom_call.1} parent=1 // pred_region
      %s870 = ssub.s32 256, 256
      %871 = vsyncadd [#allocation10], %s870
      %s872 = sshll.u32 [#allocation11], 4
      %s873 = int_to_ptr.vmem [resolvable:$true] %s872
      %878 = dma.vmem_to_hbm [thread:$0]  %s873, 256, %s5, [#allocation10], 128, 128, 8
    $region37: #{tpu_custom_call.1} parent=1 // pred_fallthru
      _
    // Predicated region
    $region38: #{tpu_custom_call.1} parent=1 // pred_check
      _
    $region39: #{tpu_custom_call.1} parent=1 // pred_check_branch
      %880 = sbr.rel (0) target = $region41
    $region40: #{tpu_custom_call.1} parent=1 // pred_region
      %881 = dma.done [#allocation4], 256
    $region41: #{tpu_custom_call.1} parent=1 // pred_fallthru
      _
    // Predicated region
    $region42: #{tpu_custom_call.1} parent=1 // pred_check
      _
    $region43: #{tpu_custom_call.1} parent=1 // pred_check_branch
      %883 = sbr.rel (0) target = $region45
    $region44: #{tpu_custom_call.1} parent=1 // pred_region
      %884 = dma.done [#allocation10], 256
    $region45: #{tpu_custom_call.1} parent=1 // pred_fallthru
      _
    // Predicated region
    $region46: #{tpu_custom_call.1} parent=1 // pred_check
      _
    $region47: #{tpu_custom_call.1} parent=1 // pred_check_branch
      %886 = sbr.rel (0) target = $region49
    $region48: #{tpu_custom_call.1} parent=1 // pred_region
      %887 = dma.done [#allocation10], 256
    $region49: #{tpu_custom_call.1} parent=1 // pred_fallthru
      _
    %888 = vsyncpa [#allocation3], 1
    %889 = vsyncpa [#allocation6], 1
    %890 = vsyncpa [#allocation4], 1
    %891 = vsyncpa [#allocation10], 1

</llo_original>
